<compile_context>
chip_gen: v7x
topology: tpu7x:2x2x1
jax: 0.10.0
libtpu: 0.0.40
codegen_flags: <defaults>
</compile_context>

<pallas_src>
import functools

import jax
import jax.numpy as jnp
from jax.experimental import pallas as pl
from jax.experimental.pallas import tpu as pltpu


def _round_up(x: int, m: int) -> int:
    return (x + m - 1) // m * m


def _linear_heads_kernel(x_ref, wt_ref, b_ref, o_ref):
    """o = x @ Wt + b for one (TM, TN) output tile.

    x arrives f32 (native dtype, single HBM read); cast to bf16 in VMEM right
    before the dot (VPU pack, hidden under the MXU).  f32 MXU accumulate,
    f32 bias add, f32 output (no bf16 VPU arithmetic -> v5e-safe).
    """
    x_bf16 = x_ref[...].astype(jnp.bfloat16)
    acc = jnp.dot(x_bf16, wt_ref[...], preferred_element_type=jnp.float32)
    o_ref[...] = (acc + b_ref[...]).astype(o_ref.dtype)


def _choose_c_pad(c_total: int) -> int:
    """Pad the class axis: multiple of 128, larger only if waste is small."""
    base = _round_up(c_total, 128)
    for t in (1024, 512, 256):
        padded = _round_up(c_total, t)
        if padded - c_total <= max(128, c_total // 8):
            return padded
    return base


def prepare_stacked_params(weights, biases, compute_dtype=jnp.bfloat16):
    """Stack per-head params once (only rebuilt when a head is added).

    Args:
      weights: list of [nb_classes_i, embed_dim] f32 arrays (one per head)
      biases:  list of [nb_classes_i] f32 arrays (one per head)
    Returns:
      wt_padded: [embed_dim, c_pad] compute_dtype (pre-transposed, zero-padded)
      b_padded:  [1, c_pad] f32
      c_total:   int, true number of classes (sum over heads)
    """
    w_all = jnp.concatenate(weights, axis=0)             # [C_total, D]
    b_all = jnp.concatenate(biases, axis=0)              # [C_total]
    c_total, embed_dim = w_all.shape
    c_pad = _choose_c_pad(int(c_total))

    wt_padded = jnp.zeros((embed_dim, c_pad), compute_dtype)
    wt_padded = wt_padded.at[:, :c_total].set(w_all.T.astype(compute_dtype))
    b_padded = jnp.zeros((1, c_pad), jnp.float32)
    b_padded = b_padded.at[:, :c_total].set(b_all.astype(jnp.float32))
    return wt_padded, b_padded, int(c_total)


def _pick_tiles(batch: int, embed_dim: int, c_pad: int):
    """Choose (tm, m_pad, tn) under VMEM/alignment constraints."""
    # Lane-dense N tile: largest of {1024, 512, 256, 128} dividing c_pad.
    tn = 128
    for cand in (1024, 512, 256):
        if c_pad % cand == 0:
            tn = cand
            break

    # M tile: full batch (no padding) when small; otherwise 512-row tiles so
    # x is streamed in few, long DMAs and grid_M stays tiny.
    if batch <= 512:
        tm, m_pad = batch, batch
    else:
        tm = 512
        m_pad = _round_up(batch, tm)

    # VMEM guard: double-buffered x(f32) + W(bf16) + bias(f32) + out(f32).
    def footprint(tm_, tn_):
        return 2 * (tm_ * embed_dim * 4 + embed_dim * tn_ * 2
                    + tn_ * 4 + tm_ * tn_ * 4)

    budget = 24 * 1024 * 1024
    while footprint(tm, tn) > budget and tn > 128:
        tn //= 2
    while footprint(tm, tn) > budget and tm > 128:
        tm = 128 if tm <= 256 else 256
        m_pad = _round_up(batch, tm)

    # v7x has 2 TensorCores sharded over parallel grid axes: make sure the
    # grid has >=2 steps when cheap (one extra step is noise on 1-TC chips).
    if (c_pad // tn) * (m_pad // tm) == 1 and c_pad >= 256:
        for cand in (512, 256, 128):
            if cand < c_pad and c_pad % cand == 0:
                tn = cand
                break

    return tm, m_pad, tn


@functools.partial(jax.jit, static_argnames=("c_total",))
def incremental_classifier_forward(x, wt_padded, b_padded, *, c_total):
    """
    Args:
      x:         [batch, embed_dim] f32 input features (native dtype; cast to
                 bf16 inside the kernel)
      wt_padded: [embed_dim, c_pad] bf16 pre-stacked, pre-transposed weights
      b_padded:  [1, c_pad] f32 pre-stacked biases
      c_total:   true number of classes (static)
    Returns:
      [batch, c_total] f32 — per-head logits concatenated on dim 1.
    """
    batch, embed_dim = x.shape
    c_pad = wt_padded.shape[1]

    tm, m_pad, tn = _pick_tiles(batch, embed_dim, c_pad)

    x_in = x
    if m_pad != batch:  # only for large, ragged batches
        x_in = jnp.pad(x, ((0, m_pad - batch), (0, 0)))

    grid_n = c_pad // tn
    grid_m = m_pad // tm
    # Grid: N outer, M inner.  W / bias block indices depend only on the outer
    # axis -> W streamed from HBM exactly once; x re-streamed grid_n times
    # (x is the small array in this regime).
    grid = (grid_n, grid_m)

    flops = 2 * m_pad * embed_dim * c_pad
    bytes_accessed = (
        grid_n * m_pad * embed_dim * 4     # x (f32), re-read once per N tile
        + embed_dim * c_pad * 2            # W (bf16), streamed once
        + c_pad * 4                        # bias (f32), streamed once
        + m_pad * c_pad * 4                # out (f32), written once
    )

    out = pl.pallas_call(
        _linear_heads_kernel,
        out_shape=jax.ShapeDtypeStruct((m_pad, c_pad), jnp.float32),
        grid_spec=pltpu.PrefetchScalarGridSpec(
            num_scalar_prefetch=0,
            grid=grid,
            in_specs=[
                pl.BlockSpec((tm, embed_dim), lambda j, i: (i, 0)),
                pl.BlockSpec((embed_dim, tn), lambda j, i: (0, j)),
                pl.BlockSpec((1, tn), lambda j, i: (0, j)),
            ],
            out_specs=pl.BlockSpec((tm, tn), lambda j, i: (i, j)),
        ),
        compiler_params=pltpu.CompilerParams(
            dimension_semantics=("parallel", "parallel")),
        cost_estimate=pl.CostEstimate(
            flops=flops, transcendentals=0, bytes_accessed=bytes_accessed),
    )(x_in, wt_padded, b_padded)

    # Strip padding only if any exists (no-op slice otherwise).
    if m_pad != batch or c_pad != c_total:
        out = out[:batch, :c_total]
    return out


def _trunc_normal(key, shape, std=0.02):
    # nn.init.trunc_normal_(std=0.02) truncates at +/- 2 std.
    return std * jax.random.truncated_normal(key, -2.0, 2.0, shape, jnp.float32)


def _run_case(key, batch, embed_dim, head_classes):
    keys = jax.random.split(key, 1 + len(head_classes))
    x = jax.random.normal(keys[0], (batch, embed_dim), dtype=jnp.float32)
    weights = [_trunc_normal(k, (c, embed_dim))
               for k, c in zip(keys[1:], head_classes)]
    biases = [jnp.zeros((c,), jnp.float32) for c in head_classes]

    # Done once per heads-update (NOT per forward).
    wt_padded, b_padded, c_total = prepare_stacked_params(weights, biases)

    out = incremental_classifier_forward(x, wt_padded, b_padded, c_total=c_total)
    out = jax.block_until_ready(out)

    # Reference in plain JAX (same math as the PyTorch forward).
    ref = jnp.concatenate([x @ w.T + b for w, b in zip(weights, biases)], axis=1)
    assert out.shape == (batch, sum(head_classes)), out.shape
    # bf16 weight/activation cast -> slightly looser tolerance than pure f32.
    assert jnp.allclose(out, ref, atol=1e-2, rtol=1e-2)


if __name__ == "__main__":
    key = jax.random.PRNGKey(0)
    k0, k1 = jax.random.split(key)

    # Case 1: initial head (__init__) + one head added via update(); small.
    _run_case(k0, batch=8, embed_dim=32, head_classes=[10, 6])

    # Case 2: exercises multi-tile class axis + class-padding slice path.
    _run_case(k1, batch=16, embed_dim=32, head_classes=[100, 40])

    print("KERNEL_OK")
</pallas_src>

<mosaic_0001>
module attributes {stable_mosaic.version = 11 : i64} {
  func.func @_linear_heads_kernel(%arg0: i32, %arg1: i32, %arg2: memref<8x32xf32, #tpu.memory_space<vmem>>, %arg3: memref<32x128xbf16, #tpu.memory_space<vmem>>, %arg4: memref<1x128xf32, #tpu.memory_space<vmem>>, %arg5: memref<8x128xf32, #tpu.memory_space<vmem>>) attributes {dimension_semantics = [#tpu.dimension_semantics<parallel>, #tpu.dimension_semantics<parallel>], iteration_bounds = array<i64: 1, 1>, scalar_prefetch = 0 : i64, scratch_operands = 0 : i64, tpu.core_type = #tpu.core_type<tc>, window_params = [{transform_indices = @transform_0, window_bounds = array<i64: 8, 32>}, {transform_indices = @transform_1, window_bounds = array<i64: 32, 128>}, {transform_indices = @transform_2, window_bounds = array<i64: 1, 128>}, {transform_indices = @transform_3, window_bounds = array<i64: 8, 128>}]} {
    %c0 = arith.constant 0 : index
    %c0_0 = arith.constant 0 : index
    %0 = vector.load %arg2[%c0, %c0_0] : memref<8x32xf32, #tpu.memory_space<vmem>>, vector<8x32xf32>
    %1 = arith.truncf %0 : vector<8x32xf32> to vector<8x32xbf16>
    %c0_1 = arith.constant 0 : index
    %c0_2 = arith.constant 0 : index
    %2 = vector.load %arg3[%c0_1, %c0_2] : memref<32x128xbf16, #tpu.memory_space<vmem>>, vector<32x128xbf16>
    %cst = arith.constant dense<0.000000e+00> : vector<8x128xf32>
    %3 = tpu.matmul %1, %2, %cst {dimension_numbers = #tpu.dot_dimension_numbers<[1], [0], [0], [1], [0, 0, 1, 1], [], []>} : vector<8x32xbf16>, vector<32x128xbf16>, vector<8x128xf32> -> vector<8x128xf32>
    %c0_3 = arith.constant 0 : index
    %c0_4 = arith.constant 0 : index
    %4 = vector.load %arg4[%c0_3, %c0_4] : memref<1x128xf32, #tpu.memory_space<vmem>>, vector<1x128xf32>
    %5 = vector.broadcast %4 : vector<1x128xf32> to vector<8x128xf32>
    %6 = arith.addf %3, %5 : vector<8x128xf32>
    %c0_5 = arith.constant 0 : index
    %c0_6 = arith.constant 0 : index
    %7 = vector.load %arg5[%c0_5, %c0_6] : memref<8x128xf32, #tpu.memory_space<vmem>>, vector<8x128xf32>
    tpu.vector_store %arg5[%c0_5, %c0_6], %6 {strides = array<i32>} : memref<8x128xf32, #tpu.memory_space<vmem>>, vector<8x128xf32>,
    return
  }
  func.func @transform_0(%arg0: i32, %arg1: i32) -> (i32, i32) {
    %c0_i32 = arith.constant 0 : i32
    %c0_i32_0 = arith.constant 0 : i32
    return %arg1, %c0_i32 : i32, i32
  }
  func.func @transform_1(%arg0: i32, %arg1: i32) -> (i32, i32) {
    %c0_i32 = arith.constant 0 : i32
    %c0_i32_0 = arith.constant 0 : i32
    return %c0_i32, %arg0 : i32, i32
  }
  func.func @transform_2(%arg0: i32, %arg1: i32) -> (i32, i32) {
    %c0_i32 = arith.constant 0 : i32
    %c0_i32_0 = arith.constant 0 : i32
    return %c0_i32, %arg0 : i32, i32
  }
  func.func @transform_3(%arg0: i32, %arg1: i32) -> (i32, i32) {
    %c0_i32 = arith.constant 0 : i32
    return %arg1, %arg0 : i32, i32
  }
}

</mosaic_0001>

<llo_original>
// kernel: incremental_classifier_forward.1
$region0: #{incremental_classifier_forward.1}
  #allocation0 [shape = 'u32[]', space=smem, size = 0x4, offset = 0x4, fixed_abs, tag = 'smem constant byte address 0x4 - core index']
  #allocation1 [shape = 'u32[144,128]{1,0:T(1,128)}', space=vmem, size = 0x12000, scoped, tag = 'internal scratch']
  %s0 = inlined_call_operand.hbm [shape: f32[8,32], index: 0, kind: input, shape index: {}]
  %s1 = inlined_call_operand.hbm [shape: bf16[32,128], index: 1, kind: input, shape index: {}]
  %s2 = inlined_call_operand.vmem [shape: f32[1,128], index: 2, kind: input, shape index: {}]
  %s3 = inlined_call_operand.hbm [shape: f32[8,128], index: 3, kind: output, shape index: {}]
  %s4 = sld [smem:[#allocation0]]
  $region30: #{incremental_classifier_forward.1} parent=0
    _
  %s6 = ssub.s32 1, %s4
  %s7 = scalar_select 0, %s6, %s4
  $region1: #{incremental_classifier_forward.1} parent=0
    #allocation2 [shape = 'u8[4096]{0}', space=vmem, size = 0x1000, scoped, tag = 'input window, operand 0, single buffered']
    #allocation3 [shape = 's32[1]{0}', space=sflag, size = 0x4, scoped, tag = 'scoped memory for incremental_classifier_forward.1']
    #allocation4 [shape = 's32[1]{0}', space=sflag, size = 0x4, scoped, tag = 'scoped memory for incremental_classifier_forward.1']
    #allocation5 [shape = 'u8[8192]{0}', space=vmem, size = 0x2000, scoped, tag = 'input window, operand 1, single buffered']
    #allocation6 [shape = 's32[1]{0}', space=sflag, size = 0x4, scoped, tag = 'scoped memory for incremental_classifier_forward.1']
    #allocation7 [shape = 'u8[4096]{0}', space=vmem, size = 0x1000, scoped, tag = 'output window, operand 0, single buffered']
    %8 = vsyncpa [#allocation3], 0
    %9 = vsyncpa [#allocation6], 0
    %10 = vsyncpa [#allocation4], 0
    // Predicated region
    $region2: #{incremental_classifier_forward.1} parent=1 // pred_check
      _
    $region3: #{incremental_classifier_forward.1} parent=1 // pred_check_branch
      %12 = sbr.rel (0) target = $region5
    $region4: #{incremental_classifier_forward.1} parent=1 // pred_region
      %s14 = ssub.s32 128, 128
      %15 = vsyncadd [#allocation3], %s14
      %s17 = sshll.u32 [#allocation2], 4
      %s18 = int_to_ptr.vmem [resolvable:$true] %s17
      %20 = dma.hbm_to_vmem [thread:$0]  %s0, 128, %s18, [#allocation3]
    $region5: #{incremental_classifier_forward.1} parent=1 // pred_fallthru
      _
    // Predicated region
    $region6: #{incremental_classifier_forward.1} parent=1 // pred_check
      _
    $region7: #{incremental_classifier_forward.1} parent=1 // pred_check_branch
      %22 = sbr.rel (0) target = $region9
    $region8: #{incremental_classifier_forward.1} parent=1 // pred_region
      %s24 = ssub.s32 256, 256
      %25 = vsyncadd [#allocation6], %s24
      %s26 = sshll.u32 [#allocation5], 4
      %s27 = int_to_ptr.vmem [resolvable:$true] %s26
      %32 = dma.hbm_to_vmem [thread:$0]  %s1, 256, %s27, [#allocation6], 64, 64, 4
    $region9: #{incremental_classifier_forward.1} parent=1 // pred_fallthru
      _
    // Predicated region
    $region10: #{incremental_classifier_forward.1} parent=1 // pred_check
      _
    $region11: #{incremental_classifier_forward.1} parent=1 // pred_check_branch
      %34 = sbr.rel (0) target = $region13
    $region12: #{incremental_classifier_forward.1} parent=1 // pred_region
      _
    $region13: #{incremental_classifier_forward.1} parent=1 // pred_fallthru
      _
    // Predicated region
    $region14: #{incremental_classifier_forward.1} parent=1 // pred_check
      _
    $region15: #{incremental_classifier_forward.1} parent=1 // pred_check_branch
      %36 = sbr.rel (0) target = $region17
    $region16: #{incremental_classifier_forward.1} parent=1 // pred_region
      %37 = dma.done [#allocation3], 128
    $region17: #{incremental_classifier_forward.1} parent=1 // pred_fallthru
      _
    // Predicated region
    $region18: #{incremental_classifier_forward.1} parent=1 // pred_check
      _
    $region19: #{incremental_classifier_forward.1} parent=1 // pred_check_branch
      %39 = sbr.rel (0) target = $region21
    $region20: #{incremental_classifier_forward.1} parent=1 // pred_region
      %40 = dma.done [#allocation6], 256
    $region21: #{incremental_classifier_forward.1} parent=1 // pred_fallthru
      _
    %v42 = vld [vmem:[#allocation2] sm:$0xff]
    %v43 = vpack.c.bf16 %v42, %v42
    %v44 = vld [vmem:[#allocation5] sm:$0xf]
    %v45 = vld [vmem:[#allocation5 + $0x4] sm:$0xf]
    %v46 = vld [vmem:[#allocation5 + $0x8] sm:$0xf]
    %v47 = vld [vmem:[#allocation5 + $0xc] sm:$0xf]
    %v48 = vld [vmem:[%s2] sm:$0x1]
    %v50 = vlaneseq
    %v51 = vshrl.u32 %v50, 7
    %v52 = vsub.s32 0, %v51
    %v53 = vrot.slane %v48, %v52
    %v59 = vunpack.c.l.b16 %v44
    %v60 = vunpack.c.l.b16 %v45
    %v61 = vunpack.c.l.b16 %v46
    %v62 = vunpack.c.l.b16 %v47
    %v63 = vpack.c.b16 %v60, %v59
    %v64 = vpack.c.b16 %v62, %v61
    %vm67 = vcmask 261120
    %v69 = vsel %vm67, %v43, 0
    %71 = vmatprep.subr.bf16.mxu0 0
    %72 = vmatpush1.bf16.msra.mxu0 %v63
    %73 = vmatprep.subr.bf16.mxu0 0
    %74 = vmatpush1.bf16.msra.mxu0 %v64
    %75 = vmatprep.subr.bf16.mxu0 0
    %76 = vmatpush1.bf16.msra.mxu0 0
    %77 = vmatprep.subr.bf16.mxu0 0
    %78 = vmatpush1.bf16.msra.mxu0 0
    %79 = vmatprep.subr.bf16.mxu0 0
    %80 = vmatpush1.bf16.msra.mxu0 0
    %81 = vmatprep.subr.bf16.mxu0 0
    %82 = vmatpush1.bf16.msra.mxu0 0
    %83 = vmatprep.subr.bf16.mxu0 0
    %84 = vmatpush1.bf16.msra.mxu0 0
    %85 = vmatprep.subr.bf16.mxu0 0
    %86 = vmatpush1.bf16.msra.mxu0 0
    %87 = vmatprep.subr.bf16.mxu0 0
    %88 = vmatpush1.bf16.msra.mxu0 0
    %89 = vmatprep.subr.bf16.mxu0 0
    %90 = vmatpush1.bf16.msra.mxu0 0
    %91 = vmatprep.subr.bf16.mxu0 0
    %92 = vmatpush1.bf16.msra.mxu0 0
    %93 = vmatprep.subr.bf16.mxu0 0
    %94 = vmatpush1.bf16.msra.mxu0 0
    %95 = vmatprep.subr.bf16.mxu0 0
    %96 = vmatpush1.bf16.msra.mxu0 0
    %97 = vmatprep.subr.bf16.mxu0 0
    %98 = vmatpush1.bf16.msra.mxu0 0
    %99 = vmatprep.subr.bf16.mxu0 0
    %100 = vmatpush1.bf16.msra.mxu0 0
    %101 = vmatprep.subr.bf16.mxu0 0
    %102 = vmatpush1.bf16.msra.mxu0 0
    %103 = vmatprep.mubr.bf16.mxu0 0
    %104 = vmatmul.mubr.bf16.gmra.mrb[0].mxu0 %v69
    %v105 = vpop.f32.mrb[0].mxu0
    %v106 = vadd.f32 %v53, %v105
    %v107 = vpop.f32.mrb[0].mxu0
    %v108 = vpop.f32.mrb[0].mxu0
    %v109 = vpop.f32.mrb[0].mxu0
    %110 = vdwg.mxu0
    %111 = vst [vmem:[#allocation7] sm:$0xff] %v106
    // Predicated region
    $region22: #{incremental_classifier_forward.1} parent=1 // pred_check
      _
    $region23: #{incremental_classifier_forward.1} parent=1 // pred_check_branch
      %113 = sbr.rel (0) target = $region25
    $region24: #{incremental_classifier_forward.1} parent=1 // pred_region
      %s115 = ssub.s32 128, 128
      %116 = vsyncadd [#allocation4], %s115
      %s118 = sshll.u32 [#allocation7], 4
      %s119 = int_to_ptr.vmem [resolvable:$true] %s118
      %121 = dma.vmem_to_hbm [thread:$0]  %s119, 128, %s3, [#allocation4]
    $region25: #{incremental_classifier_forward.1} parent=1 // pred_fallthru
      _
    // Predicated region
    $region26: #{incremental_classifier_forward.1} parent=1 // pred_check
      _
    $region27: #{incremental_classifier_forward.1} parent=1 // pred_check_branch
      %123 = sbr.rel (0) target = $region29
    $region28: #{incremental_classifier_forward.1} parent=1 // pred_region
      %124 = dma.done [#allocation4], 128
    $region29: #{incremental_classifier_forward.1} parent=1 // pred_fallthru
      _
    %125 = vsyncpa [#allocation3], 1
    %126 = vsyncpa [#allocation6], 1
    %127 = vsyncpa [#allocation4], 1

</llo_original>
